<compile_context>
chip_gen: v6e
topology: v6e:2x2x1
jax: 0.10.0
libtpu: 0.0.40
codegen_flags: <defaults>
</compile_context>

<pallas_src>
import jax
import jax.numpy as jnp
from jax.experimental import pallas as pl
from jax.experimental.pallas import tpu as pltpu


NEG_SLOPE = 0.01  # torch.nn.functional.leaky_relu default


def _leaky_relu(x):
    return jnp.where(x > 0, x, NEG_SLOPE * x)


def nn_pi_kernel(xT_ref, w1_ref, b1_ref, w2_ref, b2_ref, w3_ref, b3_ref, oT_ref):
    """Transposed MLP: every activation is [features, batch] (batch on lanes)."""
    xT = xT_ref[...]                                                  # [in, tb]

    # Layer 0: Linear(inSize -> h1)            h^T = W1 @ x^T + b1
    h = jnp.dot(w1_ref[...], xT, preferred_element_type=jnp.float32) + b1_ref[...]

    # leaky_relu -> Linear(h1 -> h2)
    h = _leaky_relu(h)
    h = jnp.dot(w2_ref[...], h, preferred_element_type=jnp.float32) + b2_ref[...]

    # leaky_relu -> Linear(h2 -> outSize)
    h = _leaky_relu(h)
    logits = jnp.dot(w3_ref[...], h, preferred_element_type=jnp.float32) + b3_ref[...]

    # Softmax over the feature axis (sublanes, axis 0) == torch F.softmax with
    # its implicit dim=1 on the untransposed [B, outSize] logits.
    # Exact divide so each column sums to 1 to f32 rounding (the approx EUP
    # reciprocal previously broke the normalization check).
    m = jnp.max(logits, axis=0, keepdims=True)
    e = jnp.exp(logits - m)
    denom = jnp.sum(e, axis=0, keepdims=True)
    oT_ref[...] = (e / denom).astype(oT_ref.dtype)


def _pick_batch_cols(B):
    """Batch columns (lane axis) per grid step.

    - B <= 1024: one full-batch tile.  A full-extent block needs no 128-lane
      alignment, so there is no ragged-tail waste and no extra per-step cost.
    - Larger B: tiles up to 8192 columns (amortizes the ~0.35 us/step pipeline
      overhead, bigger DMAs), an even number of grid steps so a 2-TensorCore
      (v7x) split is balanced, and 128-column alignment so any ragged tail
      wastes < 128 columns (columns are independent; padded columns are
      computed but masked on store).
    """
    if B <= 1024:
        return B
    cap = 8192
    steps = -(-B // cap)                    # ceil-div
    if steps % 2:
        steps += 1                          # even step count for a 2-TC split
    steps = max(steps, 2)
    tb = -(-B // steps)
    return -(-tb // 128) * 128              # 128-lane alignment


def nn_pi_forward(x, params, *, batch_cols=None):
    """x: [B, inSize] f32.  params: PyTorch-layout w_i [out, in], b_i [out, 1]."""
    w1, b1 = params["w1"], params["b1"]
    w2, b2 = params["w2"], params["b2"]
    w3, b3 = params["w3"], params["b3"]
    B, in_size = x.shape
    h1, h2, out_size = w1.shape[0], w2.shape[0], w3.shape[0]

    tb = min(batch_cols, B) if batch_cols is not None else _pick_batch_cols(B)
    grid = (pl.cdiv(B, tb),)

    # Batch on the lane axis: dense (8,128) HBM layout for x / out and
    # lane-dense intermediates + unmasked stores in the kernel.
    xT = x.T                                # [inSize, B]

    # Grid-invariant operands: constant block index -> DMA'd once by the pipeline.
    full = lambda arr: pl.BlockSpec(arr.shape, lambda i: (0, 0))

    weight_bytes = 4 * sum(int(p.size) for p in (w1, b1, w2, b2, w3, b3))
    cost = pl.CostEstimate(
        flops=2 * B * (in_size * h1 + h1 * h2 + h2 * out_size),
        transcendentals=B * out_size,                      # exp in softmax
        bytes_accessed=4 * B * (in_size + out_size) + weight_bytes,
    )

    outT = pl.pallas_call(
        nn_pi_kernel,
        out_shape=jax.ShapeDtypeStruct((out_size, B), jnp.float32),
        grid=grid,
        in_specs=[
            pl.BlockSpec((in_size, tb), lambda i: (0, i)),   # x^T tiled over batch cols
            full(w1), full(b1),
            full(w2), full(b2),
            full(w3), full(b3),
        ],
        out_specs=pl.BlockSpec((out_size, tb), lambda i: (0, i)),
        compiler_params=pltpu.CompilerParams(
            # TODO(synk): verify in an xprof trace that this axis really shards
            # across both v7x TensorCores; if not, switch to pltpu.CORE_PARALLEL
            # (plain "parallel" vs "arbitrary" is near-identical codegen).
            dimension_semantics=("parallel",),
            vmem_limit_bytes=28 * 1024 * 1024,  # explicit; inside v7x 32 MiB scoped default
        ),
        cost_estimate=cost,
    )(xT, w1, b1, w2, b2, w3, b3)

    return outT.T                            # [B, outSize]


def init_params(key, in_size, layers, out_size):
    """PyTorch nn.Linear layout ([out, in] weights, [out, 1] biases),
    U(-1/sqrt(fan_in), 1/sqrt(fan_in)) init."""
    sizes = [in_size] + list(layers) + [out_size]
    params = {}
    for idx in range(len(sizes) - 1):
        fan_in, fan_out = sizes[idx], sizes[idx + 1]
        key, kw, kb = jax.random.split(key, 3)
        bound = 1.0 / jnp.sqrt(jnp.float32(fan_in))
        params[f"w{idx+1}"] = jax.random.uniform(
            kw, (fan_out, fan_in), jnp.float32, -bound, bound)
        params[f"b{idx+1}"] = jax.random.uniform(
            kb, (fan_out, 1), jnp.float32, -bound, bound)
    return params


def nn_pi_reference(x, params):
    h = x @ params["w1"].T + params["b1"][:, 0]
    h = jnp.where(h > 0, h, NEG_SLOPE * h)
    h = h @ params["w2"].T + params["b2"][:, 0]
    h = jnp.where(h > 0, h, NEG_SLOPE * h)
    logits = h @ params["w3"].T + params["b3"][:, 0]
    return jax.nn.softmax(logits, axis=-1)


if __name__ == "__main__":
    key = jax.random.PRNGKey(0)

    # NN_Pi(inSize=32, outSize=16, layers=[64, 32])
    in_size, layers, out_size = 32, [64, 32], 16
    key, kp = jax.random.split(key)
    params = init_params(kp, in_size, layers, out_size)

    # B=8    -> single full-batch tile (tiny case)
    # B=300  -> single full-batch tile (no ragged tail at all)
    # B=512  -> single full-batch tile, 512 lane-dense columns
    # B=2560 -> 2 x 1280-column tiles (128-aligned, even step count)
    for B in (8, 300, 512, 2560):
        key, kx = jax.random.split(key)
        x = jax.random.normal(kx, (B, in_size), jnp.float32)

        out = jax.block_until_ready(nn_pi_forward(x, params))
        ref = nn_pi_reference(x, params)

        assert out.shape == (B, out_size)
        assert jnp.allclose(out, ref, atol=1e-3, rtol=1e-3), f"mismatch vs reference (B={B})"
        assert jnp.allclose(jnp.sum(out, axis=-1), 1.0, atol=1e-3), f"rows must sum to 1 (B={B})"

    print("KERNEL_OK")
</pallas_src>

<mosaic_0001>
module attributes {stable_mosaic.version = 11 : i64} {
  func.func @nn_pi_kernel(%arg0: i32, %arg1: memref<32x8xf32, #tpu.memory_space<vmem>>, %arg2: memref<64x32xf32, #tpu.memory_space<vmem>>, %arg3: memref<64x1xf32, #tpu.memory_space<vmem>>, %arg4: memref<32x64xf32, #tpu.memory_space<vmem>>, %arg5: memref<32x1xf32, #tpu.memory_space<vmem>>, %arg6: memref<16x32xf32, #tpu.memory_space<vmem>>, %arg7: memref<16x1xf32, #tpu.memory_space<vmem>>, %arg8: memref<16x8xf32, #tpu.memory_space<vmem>>) attributes {dimension_semantics = [#tpu.dimension_semantics<parallel>], iteration_bounds = array<i64: 1>, scalar_prefetch = 0 : i64, scratch_operands = 0 : i64, tpu.core_type = #tpu.core_type<tc>, window_params = [{transform_indices = @transform_0, window_bounds = array<i64: 32, 8>}, {pipeline_mode = #tpu.pipeline_mode<synchronous>, transform_indices = @transform_1, window_bounds = array<i64: 64, 32>}, {pipeline_mode = #tpu.pipeline_mode<synchronous>, transform_indices = @transform_2, window_bounds = array<i64: 64, 1>}, {pipeline_mode = #tpu.pipeline_mode<synchronous>, transform_indices = @transform_3, window_bounds = array<i64: 32, 64>}, {pipeline_mode = #tpu.pipeline_mode<synchronous>, transform_indices = @transform_4, window_bounds = array<i64: 32, 1>}, {pipeline_mode = #tpu.pipeline_mode<synchronous>, transform_indices = @transform_5, window_bounds = array<i64: 16, 32>}, {pipeline_mode = #tpu.pipeline_mode<synchronous>, transform_indices = @transform_6, window_bounds = array<i64: 16, 1>}, {transform_indices = @transform_7, window_bounds = array<i64: 16, 8>}]} {
    %c0 = arith.constant 0 : index
    %c0_0 = arith.constant 0 : index
    %0 = vector.load %arg1[%c0, %c0_0] : memref<32x8xf32, #tpu.memory_space<vmem>>, vector<32x8xf32>
    %c0_1 = arith.constant 0 : index
    %c0_2 = arith.constant 0 : index
    %1 = vector.load %arg2[%c0_1, %c0_2] : memref<64x32xf32, #tpu.memory_space<vmem>>, vector<64x32xf32>
    %cst = arith.constant dense<0.000000e+00> : vector<64x8xf32>
    %2 = tpu.matmul %1, %0, %cst {dimension_numbers = #tpu.dot_dimension_numbers<[1], [0], [0], [1], [0, 0, 1, 1], [], []>} : vector<64x32xf32>, vector<32x8xf32>, vector<64x8xf32> -> vector<64x8xf32>
    %c0_3 = arith.constant 0 : index
    %c0_4 = arith.constant 0 : index
    %3 = vector.load %arg3[%c0_3, %c0_4] : memref<64x1xf32, #tpu.memory_space<vmem>>, vector<64x1xf32>
    %4 = vector.broadcast %3 : vector<64x1xf32> to vector<64x8xf32>
    %5 = arith.addf %2, %4 : vector<64x8xf32>
    %cst_5 = arith.constant 0.000000e+00 : f32
    %6 = vector.broadcast %cst_5 : f32 to vector<64x8xf32>
    %7 = arith.cmpf ogt, %5, %6 : vector<64x8xf32>
    %cst_6 = arith.constant 0.00999999977 : f32
    %8 = vector.broadcast %cst_6 : f32 to vector<64x8xf32>
    %9 = arith.mulf %8, %5 : vector<64x8xf32>
    %10 = arith.select %7, %5, %9 : vector<64x8xi1>, vector<64x8xf32>
    %c0_7 = arith.constant 0 : index
    %c0_8 = arith.constant 0 : index
    %11 = vector.load %arg4[%c0_7, %c0_8] : memref<32x64xf32, #tpu.memory_space<vmem>>, vector<32x64xf32>
    %cst_9 = arith.constant dense<0.000000e+00> : vector<32x8xf32>
    %12 = tpu.matmul %11, %10, %cst_9 {dimension_numbers = #tpu.dot_dimension_numbers<[1], [0], [0], [1], [0, 0, 1, 1], [], []>} : vector<32x64xf32>, vector<64x8xf32>, vector<32x8xf32> -> vector<32x8xf32>
    %c0_10 = arith.constant 0 : index
    %c0_11 = arith.constant 0 : index
    %13 = vector.load %arg5[%c0_10, %c0_11] : memref<32x1xf32, #tpu.memory_space<vmem>>, vector<32x1xf32>
    %14 = vector.broadcast %13 : vector<32x1xf32> to vector<32x8xf32>
    %15 = arith.addf %12, %14 : vector<32x8xf32>
    %cst_12 = arith.constant 0.000000e+00 : f32
    %16 = vector.broadcast %cst_12 : f32 to vector<32x8xf32>
    %17 = arith.cmpf ogt, %15, %16 : vector<32x8xf32>
    %cst_13 = arith.constant 0.00999999977 : f32
    %18 = vector.broadcast %cst_13 : f32 to vector<32x8xf32>
    %19 = arith.mulf %18, %15 : vector<32x8xf32>
    %20 = arith.select %17, %15, %19 : vector<32x8xi1>, vector<32x8xf32>
    %c0_14 = arith.constant 0 : index
    %c0_15 = arith.constant 0 : index
    %21 = vector.load %arg6[%c0_14, %c0_15] : memref<16x32xf32, #tpu.memory_space<vmem>>, vector<16x32xf32>
    %cst_16 = arith.constant dense<0.000000e+00> : vector<16x8xf32>
    %22 = tpu.matmul %21, %20, %cst_16 {dimension_numbers = #tpu.dot_dimension_numbers<[1], [0], [0], [1], [0, 0, 1, 1], [], []>} : vector<16x32xf32>, vector<32x8xf32>, vector<16x8xf32> -> vector<16x8xf32>
    %c0_17 = arith.constant 0 : index
    %c0_18 = arith.constant 0 : index
    %23 = vector.load %arg7[%c0_17, %c0_18] : memref<16x1xf32, #tpu.memory_space<vmem>>, vector<16x1xf32>
    %24 = vector.broadcast %23 : vector<16x1xf32> to vector<16x8xf32>
    %25 = arith.addf %22, %24 : vector<16x8xf32>
    %cst_19 = arith.constant dense<0xFF800000> : vector<8xf32>
    %26 = vector.multi_reduction <maximumf>, %25, %cst_19 [0] : vector<16x8xf32> to vector<8xf32>
    %27 = vector.shape_cast %26 : vector<8xf32> to vector<1x8xf32>
    %28 = vector.broadcast %27 : vector<1x8xf32> to vector<16x8xf32>
    %29 = arith.subf %25, %28 : vector<16x8xf32>
    %30 = math.exp %29 : vector<16x8xf32>
    %cst_20 = arith.constant dense<0.000000e+00> : vector<8xf32>
    %31 = vector.multi_reduction <add>, %30, %cst_20 [0] : vector<16x8xf32> to vector<8xf32>
    %32 = vector.shape_cast %31 : vector<8xf32> to vector<1x8xf32>
    %33 = vector.broadcast %32 : vector<1x8xf32> to vector<16x8xf32>
    %34 = arith.divf %30, %33 : vector<16x8xf32>
    %c0_21 = arith.constant 0 : index
    %c0_22 = arith.constant 0 : index
    %35 = vector.load %arg8[%c0_21, %c0_22] : memref<16x8xf32, #tpu.memory_space<vmem>>, vector<16x8xf32>
    tpu.vector_store %arg8[%c0_21, %c0_22], %34 {strides = array<i32>} : memref<16x8xf32, #tpu.memory_space<vmem>>, vector<16x8xf32>,
    return
  }
  func.func @transform_0(%arg0: i32) -> (i32, i32) {
    %c0_i32 = arith.constant 0 : i32
    %c0_i32_0 = arith.constant 0 : i32
    return %c0_i32, %arg0 : i32, i32
  }
  func.func @transform_1(%arg0: i32) -> (i32, i32) {
    %c0_i32 = arith.constant 0 : i32
    %c0_i32_0 = arith.constant 0 : i32
    %c0_i32_1 = arith.constant 0 : i32
    return %c0_i32, %c0_i32_0 : i32, i32
  }
  func.func @transform_2(%arg0: i32) -> (i32, i32) {
    %c0_i32 = arith.constant 0 : i32
    %c0_i32_0 = arith.constant 0 : i32
    %c0_i32_1 = arith.constant 0 : i32
    return %c0_i32, %c0_i32_0 : i32, i32
  }
  func.func @transform_3(%arg0: i32) -> (i32, i32) {
    %c0_i32 = arith.constant 0 : i32
    %c0_i32_0 = arith.constant 0 : i32
    %c0_i32_1 = arith.constant 0 : i32
    return %c0_i32, %c0_i32_0 : i32, i32
  }
  func.func @transform_4(%arg0: i32) -> (i32, i32) {
    %c0_i32 = arith.constant 0 : i32
    %c0_i32_0 = arith.constant 0 : i32
    %c0_i32_1 = arith.constant 0 : i32
    return %c0_i32, %c0_i32_0 : i32, i32
  }
  func.func @transform_5(%arg0: i32) -> (i32, i32) {
    %c0_i32 = arith.constant 0 : i32
    %c0_i32_0 = arith.constant 0 : i32
    %c0_i32_1 = arith.constant 0 : i32
    return %c0_i32, %c0_i32_0 : i32, i32
  }
  func.func @transform_6(%arg0: i32) -> (i32, i32) {
    %c0_i32 = arith.constant 0 : i32
    %c0_i32_0 = arith.constant 0 : i32
    %c0_i32_1 = arith.constant 0 : i32
    return %c0_i32, %c0_i32_0 : i32, i32
  }
  func.func @transform_7(%arg0: i32) -> (i32, i32) {
    %c0_i32 = arith.constant 0 : i32
    %c0_i32_0 = arith.constant 0 : i32
    return %c0_i32, %arg0 : i32, i32
  }
}

</mosaic_0001>

<llo_original>
// kernel: tpu_custom_call.1
$region0: #{tpu_custom_call.1}
  #allocation0 [shape = 'u32[]', space=smem, size = 0x4, offset = 0x4, fixed_abs, tag = 'smem constant byte address 0x4 - core index']
  #allocation1 [shape = 'u32[144,128]{1,0:T(1,128)}', space=vmem, size = 0x12000, scoped, tag = 'internal scratch']
  %s0 = inlined_call_operand.vmem [shape: f32[32,8], index: 0, kind: input, shape index: {}]
  %s1 = inlined_call_operand.vmem [shape: f32[64,32], index: 1, kind: input, shape index: {}]
  %s2 = inlined_call_operand.vmem [shape: f32[64,1], index: 2, kind: input, shape index: {}]
  %s3 = inlined_call_operand.vmem [shape: f32[32,64], index: 3, kind: input, shape index: {}]
  %s4 = inlined_call_operand.vmem [shape: f32[32,1], index: 4, kind: input, shape index: {}]
  %s5 = inlined_call_operand.vmem [shape: f32[16,32], index: 5, kind: input, shape index: {}]
  %s6 = inlined_call_operand.vmem [shape: f32[16,1], index: 6, kind: input, shape index: {}]
  %s7 = inlined_call_operand.vmem [shape: f32[16,8], index: 7, kind: output, shape index: {}]
  %s8 = sld [smem:[#allocation0]]
  $region38: #{tpu_custom_call.1} parent=0
    _
  %s10 = ssub.s32 1, %s8
  %s11 = scalar_select 0, %s10, %s8
  // Predicated region
  $region2: #{tpu_custom_call.1} parent=0 // pred_check
    _
  $region3: #{tpu_custom_call.1} parent=0 // pred_check_branch
    %13 = sbr.rel (0) target = $region5
  $region4: #{tpu_custom_call.1} parent=0 // pred_region
    _
  $region5: #{tpu_custom_call.1} parent=0 // pred_fallthru
    _
  // Predicated region
  $region6: #{tpu_custom_call.1} parent=0 // pred_check
    _
  $region7: #{tpu_custom_call.1} parent=0 // pred_check_branch
    %15 = sbr.rel (0) target = $region9
  $region8: #{tpu_custom_call.1} parent=0 // pred_region
    _
  $region9: #{tpu_custom_call.1} parent=0 // pred_fallthru
    _
  // Predicated region
  $region10: #{tpu_custom_call.1} parent=0 // pred_check
    _
  $region11: #{tpu_custom_call.1} parent=0 // pred_check_branch
    %17 = sbr.rel (0) target = $region13
  $region12: #{tpu_custom_call.1} parent=0 // pred_region
    _
  $region13: #{tpu_custom_call.1} parent=0 // pred_fallthru
    _
  // Predicated region
  $region14: #{tpu_custom_call.1} parent=0 // pred_check
    _
  $region15: #{tpu_custom_call.1} parent=0 // pred_check_branch
    %19 = sbr.rel (0) target = $region17
  $region16: #{tpu_custom_call.1} parent=0 // pred_region
    _
  $region17: #{tpu_custom_call.1} parent=0 // pred_fallthru
    _
  // Predicated region
  $region18: #{tpu_custom_call.1} parent=0 // pred_check
    _
  $region19: #{tpu_custom_call.1} parent=0 // pred_check_branch
    %21 = sbr.rel (0) target = $region21
  $region20: #{tpu_custom_call.1} parent=0 // pred_region
    _
  $region21: #{tpu_custom_call.1} parent=0 // pred_fallthru
    _
  // Predicated region
  $region22: #{tpu_custom_call.1} parent=0 // pred_check
    _
  $region23: #{tpu_custom_call.1} parent=0 // pred_check_branch
    %23 = sbr.rel (0) target = $region25
  $region24: #{tpu_custom_call.1} parent=0 // pred_region
    _
  $region25: #{tpu_custom_call.1} parent=0 // pred_fallthru
    _
  // Predicated region
  $region26: #{tpu_custom_call.1} parent=0 // pred_check
    _
  $region27: #{tpu_custom_call.1} parent=0 // pred_check_branch
    %25 = sbr.rel (0) target = $region29
  $region28: #{tpu_custom_call.1} parent=0 // pred_region
    _
  $region29: #{tpu_custom_call.1} parent=0 // pred_fallthru
    _
  %v26 = vld [vmem:[%s0] sm:$0xff]
  %v27 = vld [vmem:[%s0 + $0x8] sm:$0xff]
  %v28 = vld [vmem:[%s0 + $0x10] sm:$0xff]
  %v29 = vld [vmem:[%s0 + $0x18] sm:$0xff]
  %v30 = vld [vmem:[%s1] sm:$0xff]
  %v31 = vld [vmem:[%s1 + $0x8] sm:$0xff]
  %v32 = vld [vmem:[%s1 + $0x10] sm:$0xff]
  %v33 = vld [vmem:[%s1 + $0x18] sm:$0xff]
  %v34 = vld [vmem:[%s1 + $0x20] sm:$0xff]
  %v35 = vld [vmem:[%s1 + $0x28] sm:$0xff]
  %v36 = vld [vmem:[%s1 + $0x30] sm:$0xff]
  %v37 = vld [vmem:[%s1 + $0x38] sm:$0xff]
  %v38 = vld [vmem:[%s2] sm:$0xff]
  %v39 = vld [vmem:[%s2 + $0x8] sm:$0xff]
  %v40 = vld [vmem:[%s2 + $0x10] sm:$0xff]
  %v41 = vld [vmem:[%s2 + $0x18] sm:$0xff]
  %v42 = vld [vmem:[%s2 + $0x20] sm:$0xff]
  %v43 = vld [vmem:[%s2 + $0x28] sm:$0xff]
  %v44 = vld [vmem:[%s2 + $0x30] sm:$0xff]
  %v45 = vld [vmem:[%s2 + $0x38] sm:$0xff]
  %47 = vset.pattern.permute.xlu0 0
  %48 = vperm.xlu0 %47, %v38
  %v49 = vpop.permute.xlu0 %48
  %52 = vset.pattern.permute.xlu0 0
  %53 = vperm.xlu0 %52, %v39
  %v54 = vpop.permute.xlu0 %53
  %57 = vset.pattern.permute.xlu0 0
  %58 = vperm.xlu0 %57, %v40
  %v59 = vpop.permute.xlu0 %58
  %62 = vset.pattern.permute.xlu0 0
  %63 = vperm.xlu0 %62, %v41
  %v64 = vpop.permute.xlu0 %63
  %67 = vset.pattern.permute.xlu0 0
  %68 = vperm.xlu0 %67, %v42
  %v69 = vpop.permute.xlu0 %68
  %72 = vset.pattern.permute.xlu0 0
  %73 = vperm.xlu0 %72, %v43
  %v74 = vpop.permute.xlu0 %73
  %77 = vset.pattern.permute.xlu0 0
  %78 = vperm.xlu0 %77, %v44
  %v79 = vpop.permute.xlu0 %78
  %82 = vset.pattern.permute.xlu0 0
  %83 = vperm.xlu0 %82, %v45
  %v84 = vpop.permute.xlu0 %83
  %vm86 = vcmask 261120
  %v88 = vsel %vm86, %v30, 0
  %v91 = vsel %vm86, %v31, 0
  %v94 = vsel %vm86, %v32, 0
  %v97 = vsel %vm86, %v33, 0
  %v100 = vsel %vm86, %v34, 0
  %v103 = vsel %vm86, %v35, 0
  %v106 = vsel %vm86, %v36, 0
  %v109 = vsel %vm86, %v37, 0
  %111 = vmatprep.subr.mxu0 0.0
  %112 = vmatpush1.msra.mxu0 0.0
  %113 = vmatprep.subr.mxu0 0.0
  %114 = vmatpush1.msra.mxu0 0.0
  %115 = vmatprep.subr.mxu0 0.0
  %116 = vmatpush1.msra.mxu0 0.0
  %117 = vmatprep.subr.mxu0 0.0
  %118 = vmatpush1.msra.mxu0 0.0
  %119 = vmatprep.subr.mxu0 0.0
  %120 = vmatpush1.msra.mxu0 0.0
  %121 = vmatprep.subr.mxu0 0.0
  %122 = vmatpush1.msra.mxu0 0.0
  %123 = vmatprep.subr.mxu0 0.0
  %124 = vmatpush1.msra.mxu0 0.0
  %125 = vmatprep.subr.mxu0 0.0
  %126 = vmatpush1.msra.mxu0 0.0
  %127 = vmatprep.subr.mxu0 0.0
  %128 = vmatpush1.msra.mxu0 0.0
  %129 = vmatprep.subr.mxu0 0.0
  %130 = vmatpush1.msra.mxu0 0.0
  %131 = vmatprep.subr.mxu0 0.0
  %132 = vmatpush1.msra.mxu0 0.0
  %133 = vmatprep.subr.mxu0 0.0
  %134 = vmatpush1.msra.mxu0 0.0
  %135 = vmatprep.subr.mxu0 0.0
  %136 = vmatpush1.msra.mxu0 %v29
  %137 = vmatprep.subr.mxu0 0.0
  %138 = vmatpush1.msra.mxu0 %v28
  %139 = vmatprep.subr.mxu0 0.0
  %140 = vmatpush1.msra.mxu0 %v27
  %141 = vmatprep.subr.mxu0 0.0
  %142 = vmatpush1.msra.mxu0 %v26
  %143 = vmatprep.subr.mxu0 0.0
  %144 = vmatpush2.msra.mxu0 0.0
  %145 = vmatprep.subr.mxu0 0.0
  %146 = vmatpush2.msra.mxu0 0.0
  %147 = vmatprep.subr.mxu0 0.0
  %148 = vmatpush2.msra.mxu0 0.0
  %149 = vmatprep.subr.mxu0 0.0
  %150 = vmatpush2.msra.mxu0 0.0
  %151 = vmatprep.subr.mxu0 0.0
  %152 = vmatpush2.msra.mxu0 0.0
  %153 = vmatprep.subr.mxu0 0.0
  %154 = vmatpush2.msra.mxu0 0.0
  %155 = vmatprep.subr.mxu0 0.0
  %156 = vmatpush2.msra.mxu0 0.0
  %157 = vmatprep.subr.mxu0 0.0
  %158 = vmatpush2.msra.mxu0 0.0
  %159 = vmatprep.subr.mxu0 0.0
  %160 = vmatpush2.msra.mxu0 0.0
  %161 = vmatprep.subr.mxu0 0.0
  %162 = vmatpush2.msra.mxu0 0.0
  %163 = vmatprep.subr.mxu0 0.0
  %164 = vmatpush2.msra.mxu0 0.0
  %165 = vmatprep.subr.mxu0 0.0
  %166 = vmatpush2.msra.mxu0 0.0
  %167 = vmatprep.subr.mxu0 0.0
  %168 = vmatpush2.msra.mxu0 0.0
  %169 = vmatprep.subr.mxu0 0.0
  %170 = vmatpush2.msra.mxu0 0.0
  %171 = vmatprep.subr.mxu0 0.0
  %172 = vmatpush2.msra.mxu0 0.0
  %173 = vmatprep.subr.mxu0 0.0
  %174 = vmatpush2.msra.mxu0 0.0
  %175 = vmatprep.mubr.f32.mxu0 0.0
  %176 = vmatmul.mubr.f32.gmra.mxu0 %v88
  %v177 = vpop.f32.mrf.mxu0
  %v178 = vadd.f32 %v49, %v177
  %v179 = vpop.f32.mrf.mxu0
  %180 = vmatprep.mubr.f32.mxu0 0.0
  %181 = vmatmul.mubr.f32.gmra.mxu0 %v91
  %v182 = vpop.f32.mrf.mxu0
  %v183 = vadd.f32 %v54, %v182
  %v184 = vpop.f32.mrf.mxu0
  %185 = vmatprep.mubr.f32.mxu0 0.0
  %186 = vmatmul.mubr.f32.gmra.mxu0 %v94
  %v187 = vpop.f32.mrf.mxu0
  %v188 = vadd.f32 %v59, %v187
  %v189 = vpop.f32.mrf.mxu0
  %190 = vmatprep.mubr.f32.mxu0 0.0
  %191 = vmatmul.mubr.f32.gmra.mxu0 %v97
  %v192 = vpop.f32.mrf.mxu0
  %v193 = vadd.f32 %v64, %v192
  %v194 = vpop.f32.mrf.mxu0
  %195 = vmatprep.mubr.f32.mxu0 0.0
  %196 = vmatmul.mubr.f32.gmra.mxu0 %v100
  %v197 = vpop.f32.mrf.mxu0
  %v198 = vadd.f32 %v69, %v197
  %v199 = vpop.f32.mrf.mxu0
  %200 = vmatprep.mubr.f32.mxu0 0.0
  %201 = vmatmul.mubr.f32.gmra.mxu0 %v103
  %v202 = vpop.f32.mrf.mxu0
  %v203 = vadd.f32 %v74, %v202
  %v204 = vpop.f32.mrf.mxu0
  %205 = vmatprep.mubr.f32.mxu0 0.0
  %206 = vmatmul.mubr.f32.gmra.mxu0 %v106
  %v207 = vpop.f32.mrf.mxu0
  %v208 = vadd.f32 %v79, %v207
  %v209 = vpop.f32.mrf.mxu0
  %210 = vmatprep.mubr.f32.mxu0 0.0
  %211 = vmatmul.mubr.f32.gmra.mxu0 %v109
  %v212 = vpop.f32.mrf.mxu0
  %v213 = vadd.f32 %v84, %v212
  %v214 = vpop.f32.mrf.mxu0
  %215 = vdwg.mxu0
  %vm216 = vcmp.gt.f32.partialorder %v178, 0.0
  %vm217 = vcmp.gt.f32.partialorder %v183, 0.0
  %vm218 = vcmp.gt.f32.partialorder %v188, 0.0
  %vm219 = vcmp.gt.f32.partialorder %v193, 0.0
  %vm220 = vcmp.gt.f32.partialorder %v198, 0.0
  %vm221 = vcmp.gt.f32.partialorder %v203, 0.0
  %vm222 = vcmp.gt.f32.partialorder %v208, 0.0
  %vm223 = vcmp.gt.f32.partialorder %v213, 0.0
  %v224 = vmul.f32 %v178, 0.01
  %v225 = vmul.f32 %v183, 0.01
  %v226 = vmul.f32 %v188, 0.01
  %v227 = vmul.f32 %v193, 0.01
  %v228 = vmul.f32 %v198, 0.01
  %v229 = vmul.f32 %v203, 0.01
  %v230 = vmul.f32 %v208, 0.01
  %v231 = vmul.f32 %v213, 0.01
  %v232 = vsel %vm216, %v178, %v224
  %v233 = vsel %vm217, %v183, %v225
  %v234 = vsel %vm218, %v188, %v226
  %v235 = vsel %vm219, %v193, %v227
  %v236 = vsel %vm220, %v198, %v228
  %v237 = vsel %vm221, %v203, %v229
  %v238 = vsel %vm222, %v208, %v230
  %v239 = vsel %vm223, %v213, %v231
  %v240 = vld [vmem:[%s3] sm:$0xff]
  %v241 = vld [vmem:[%s3 + $0x8] sm:$0xff]
  %v242 = vld [vmem:[%s3 + $0x10] sm:$0xff]
  %v243 = vld [vmem:[%s3 + $0x18] sm:$0xff]
  %v244 = vld [vmem:[%s4] sm:$0xff]
  %v245 = vld [vmem:[%s4 + $0x8] sm:$0xff]
  %v246 = vld [vmem:[%s4 + $0x10] sm:$0xff]
  %v247 = vld [vmem:[%s4 + $0x18] sm:$0xff]
  %249 = vset.pattern.permute.xlu0 0
  %250 = vperm.xlu0 %249, %v244
  %v251 = vpop.permute.xlu0 %250
  %254 = vset.pattern.permute.xlu0 0
  %255 = vperm.xlu0 %254, %v245
  %v256 = vpop.permute.xlu0 %255
  %259 = vset.pattern.permute.xlu0 0
  %260 = vperm.xlu0 %259, %v246
  %v261 = vpop.permute.xlu0 %260
  %264 = vset.pattern.permute.xlu0 0
  %265 = vperm.xlu0 %264, %v247
  %v266 = vpop.permute.xlu0 %265
  %vm268 = vcmask 523264
  %v270 = vsel %vm268, %v240, 0
  %v273 = vsel %vm268, %v241, 0
  %v276 = vsel %vm268, %v242, 0
  %v279 = vsel %vm268, %v243, 0
  %281 = vmatprep.subr.mxu0 0.0
  %282 = vmatpush1.msra.mxu0 0.0
  %283 = vmatprep.subr.mxu0 0.0
  %284 = vmatpush1.msra.mxu0 0.0
  %285 = vmatprep.subr.mxu0 0.0
  %286 = vmatpush1.msra.mxu0 0.0
  %287 = vmatprep.subr.mxu0 0.0
  %288 = vmatpush1.msra.mxu0 0.0
  %289 = vmatprep.subr.mxu0 0.0
  %290 = vmatpush1.msra.mxu0 0.0
  %291 = vmatprep.subr.mxu0 0.0
  %292 = vmatpush1.msra.mxu0 0.0
  %293 = vmatprep.subr.mxu0 0.0
  %294 = vmatpush1.msra.mxu0 0.0
  %295 = vmatprep.subr.mxu0 0.0
  %296 = vmatpush1.msra.mxu0 0.0
  %297 = vmatprep.subr.mxu0 0.0
  %298 = vmatpush1.msra.mxu0 %v239
  %299 = vmatprep.subr.mxu0 0.0
  %300 = vmatpush1.msra.mxu0 %v238
  %301 = vmatprep.subr.mxu0 0.0
  %302 = vmatpush1.msra.mxu0 %v237
  %303 = vmatprep.subr.mxu0 0.0
  %304 = vmatpush1.msra.mxu0 %v236
  %305 = vmatprep.subr.mxu0 0.0
  %306 = vmatpush1.msra.mxu0 %v235
  %307 = vmatprep.subr.mxu0 0.0
  %308 = vmatpush1.msra.mxu0 %v234
  %309 = vmatprep.subr.mxu0 0.0
  %310 = vmatpush1.msra.mxu0 %v233
  %311 = vmatprep.subr.mxu0 0.0
  %312 = vmatpush1.msra.mxu0 %v232
  %313 = vmatprep.subr.mxu0 0.0
  %314 = vmatpush2.msra.mxu0 0.0
  %315 = vmatprep.subr.mxu0 0.0
  %316 = vmatpush2.msra.mxu0 0.0
  %317 = vmatprep.subr.mxu0 0.0
  %318 = vmatpush2.msra.mxu0 0.0
  %319 = vmatprep.subr.mxu0 0.0
  %320 = vmatpush2.msra.mxu0 0.0
  %321 = vmatprep.subr.mxu0 0.0
  %322 = vmatpush2.msra.mxu0 0.0
  %323 = vmatprep.subr.mxu0 0.0
  %324 = vmatpush2.msra.mxu0 0.0
  %325 = vmatprep.subr.mxu0 0.0
  %326 = vmatpush2.msra.mxu0 0.0
  %327 = vmatprep.subr.mxu0 0.0
  %328 = vmatpush2.msra.mxu0 0.0
  %329 = vmatprep.subr.mxu0 0.0
  %330 = vmatpush2.msra.mxu0 0.0
  %331 = vmatprep.subr.mxu0 0.0
  %332 = vmatpush2.msra.mxu0 0.0
  %333 = vmatprep.subr.mxu0 0.0
  %334 = vmatpush2.msra.mxu0 0.0
  %335 = vmatprep.subr.mxu0 0.0
  %336 = vmatpush2.msra.mxu0 0.0
  %337 = vmatprep.subr.mxu0 0.0
  %338 = vmatpush2.msra.mxu0 0.0
  %339 = vmatprep.subr.mxu0 0.0
  %340 = vmatpush2.msra.mxu0 0.0
  %341 = vmatprep.subr.mxu0 0.0
  %342 = vmatpush2.msra.mxu0 0.0
  %343 = vmatprep.subr.mxu0 0.0
  %344 = vmatpush2.msra.mxu0 0.0
  %345 = vmatprep.mubr.f32.mxu0 0.0
  %346 = vmatmul.mubr.f32.gmra.mxu0 %v270
  %v347 = vpop.f32.mrf.mxu0
  %v348 = vadd.f32 %v251, %v347
  %v349 = vpop.f32.mrf.mxu0
  %350 = vmatprep.mubr.f32.mxu0 0.0
  %351 = vmatmul.mubr.f32.gmra.mxu0 %v273
  %v352 = vpop.f32.mrf.mxu0
  %v353 = vadd.f32 %v256, %v352
  %v354 = vpop.f32.mrf.mxu0
  %355 = vmatprep.mubr.f32.mxu0 0.0
  %356 = vmatmul.mubr.f32.gmra.mxu0 %v276
  %v357 = vpop.f32.mrf.mxu0
  %v358 = vadd.f32 %v261, %v357
  %v359 = vpop.f32.mrf.mxu0
  %360 = vmatprep.mubr.f32.mxu0 0.0
  %361 = vmatmul.mubr.f32.gmra.mxu0 %v279
  %v362 = vpop.f32.mrf.mxu0
  %v363 = vadd.f32 %v266, %v362
  %v364 = vpop.f32.mrf.mxu0
  %365 = vdwg.mxu0
  %vm366 = vcmp.gt.f32.partialorder %v348, 0.0
  %vm367 = vcmp.gt.f32.partialorder %v353, 0.0
  %vm368 = vcmp.gt.f32.partialorder %v358, 0.0
  %vm369 = vcmp.gt.f32.partialorder %v363, 0.0
  %v370 = vmul.f32 %v348, 0.01
  %v371 = vmul.f32 %v353, 0.01
  %v372 = vmul.f32 %v358, 0.01
  %v373 = vmul.f32 %v363, 0.01
  %v374 = vsel %vm366, %v348, %v370
  %v375 = vsel %vm367, %v353, %v371
  %v376 = vsel %vm368, %v358, %v372
  %v377 = vsel %vm369, %v363, %v373
  %v378 = vld [vmem:[%s5] sm:$0xff]
  %v379 = vld [vmem:[%s5 + $0x8] sm:$0xff]
  %v380 = vld [vmem:[%s6] sm:$0xff]
  %v381 = vld [vmem:[%s6 + $0x8] sm:$0xff]
  %383 = vset.pattern.permute.xlu0 0
  %384 = vperm.xlu0 %383, %v380
  %v385 = vpop.permute.xlu0 %384
  %388 = vset.pattern.permute.xlu0 0
  %389 = vperm.xlu0 %388, %v381
  %v390 = vpop.permute.xlu0 %389
  %v393 = vsel %vm86, %v378, 0
  %v396 = vsel %vm86, %v379, 0
  %398 = vmatprep.subr.mxu0 0.0
  %399 = vmatpush1.msra.mxu0 0.0
  %400 = vmatprep.subr.mxu0 0.0
  %401 = vmatpush1.msra.mxu0 0.0
  %402 = vmatprep.subr.mxu0 0.0
  %403 = vmatpush1.msra.mxu0 0.0
  %404 = vmatprep.subr.mxu0 0.0
  %405 = vmatpush1.msra.mxu0 0.0
  %406 = vmatprep.subr.mxu0 0.0
  %407 = vmatpush1.msra.mxu0 0.0
  %408 = vmatprep.subr.mxu0 0.0
  %409 = vmatpush1.msra.mxu0 0.0
  %410 = vmatprep.subr.mxu0 0.0
  %411 = vmatpush1.msra.mxu0 0.0
  %412 = vmatprep.subr.mxu0 0.0
  %413 = vmatpush1.msra.mxu0 0.0
  %414 = vmatprep.subr.mxu0 0.0
  %415 = vmatpush1.msra.mxu0 0.0
  %416 = vmatprep.subr.mxu0 0.0
  %417 = vmatpush1.msra.mxu0 0.0
  %418 = vmatprep.subr.mxu0 0.0
  %419 = vmatpush1.msra.mxu0 0.0
  %420 = vmatprep.subr.mxu0 0.0
  %421 = vmatpush1.msra.mxu0 0.0
  %422 = vmatprep.subr.mxu0 0.0
  %423 = vmatpush1.msra.mxu0 %v377
  %424 = vmatprep.subr.mxu0 0.0
  %425 = vmatpush1.msra.mxu0 %v376
  %426 = vmatprep.subr.mxu0 0.0
  %427 = vmatpush1.msra.mxu0 %v375
  %428 = vmatprep.subr.mxu0 0.0
  %429 = vmatpush1.msra.mxu0 %v374
  %430 = vmatprep.subr.mxu0 0.0
  %431 = vmatpush2.msra.mxu0 0.0
  %432 = vmatprep.subr.mxu0 0.0
  %433 = vmatpush2.msra.mxu0 0.0
  %434 = vmatprep.subr.mxu0 0.0
  %435 = vmatpush2.msra.mxu0 0.0
  %436 = vmatprep.subr.mxu0 0.0
  %437 = vmatpush2.msra.mxu0 0.0
  %438 = vmatprep.subr.mxu0 0.0
  %439 = vmatpush2.msra.mxu0 0.0
  %440 = vmatprep.subr.mxu0 0.0
  %441 = vmatpush2.msra.mxu0 0.0
  %442 = vmatprep.subr.mxu0 0.0
  %443 = vmatpush2.msra.mxu0 0.0
  %444 = vmatprep.subr.mxu0 0.0
  %445 = vmatpush2.msra.mxu0 0.0
  %446 = vmatprep.subr.mxu0 0.0
  %447 = vmatpush2.msra.mxu0 0.0
  %448 = vmatprep.subr.mxu0 0.0
  %449 = vmatpush2.msra.mxu0 0.0
  %450 = vmatprep.subr.mxu0 0.0
  %451 = vmatpush2.msra.mxu0 0.0
  %452 = vmatprep.subr.mxu0 0.0
  %453 = vmatpush2.msra.mxu0 0.0
  %454 = vmatprep.subr.mxu0 0.0
  %455 = vmatpush2.msra.mxu0 0.0
  %456 = vmatprep.subr.mxu0 0.0
  %457 = vmatpush2.msra.mxu0 0.0
  %458 = vmatprep.subr.mxu0 0.0
  %459 = vmatpush2.msra.mxu0 0.0
  %460 = vmatprep.subr.mxu0 0.0
  %461 = vmatpush2.msra.mxu0 0.0
  %462 = vmatprep.mubr.f32.mxu0 0.0
  %463 = vmatmul.mubr.f32.gmra.mxu0 %v393
  %v464 = vpop.f32.mrf.mxu0
  %v465 = vadd.f32 %v385, %v464
  %v466 = vpop.f32.mrf.mxu0
  %467 = vmatprep.mubr.f32.mxu0 0.0
  %468 = vmatmul.mubr.f32.gmra.mxu0 %v396
  %v469 = vpop.f32.mrf.mxu0
  %v470 = vadd.f32 %v390, %v469
  %v471 = vpop.f32.mrf.mxu0
  %472 = vdwg.mxu0
  %vm473 = vcmask 64512
  %v474 = vsel %vm473, %v465, -inf
  %v475 = vsel %vm473, %v470, -inf
  %v476 = vmax.f32 %v474, %v475
  %v477 = vrot.slane %v476, 4
  %v478 = vmax.f32 %v476, %v477
  %v479 = vrot.slane %v478, 2
  %v480 = vmax.f32 %v478, %v479
  %v481 = vrot.slane %v480, 1
  %v482 = vmax.f32 %v480, %v481
  %v483 = vsub.f32 %v465, %v482
  %v484 = vsub.f32 %v470, %v482
  %v485 = vmul.f32 %v483, 1.442695
  %v486 = vpow.pop %v485
  %v487 = vmul.f32 %v484, 1.442695
  %v488 = vpow.pop %v487
  %v489 = vsel %vm473, %v486, 0.0
  %v490 = vsel %vm473, %v488, 0.0
  %v491 = vadd.f32 %v489, %v490
  %v492 = vrot.slane %v491, 4
  %v493 = vadd.f32 %v491, %v492
  %v494 = vrot.slane %v493, 2
  %v495 = vadd.f32 %v493, %v494
  %v496 = vrot.slane %v495, 1
  %v497 = vadd.f32 %v495, %v496
  %v498 = vrcp.pop %v497
  %v499 = vmul.f32 %v486, %v498
  %v500 = vmul.f32 %v488, %v498
  %501 = vst.msk [vmem:[%s7] sm:$0xff] %vm473, %v499
  %502 = vst.msk [vmem:[%s7 + $0x8] sm:$0xff] %vm473, %v500
  // Predicated region
  $region30: #{tpu_custom_call.1} parent=0 // pred_check
    _
  $region31: #{tpu_custom_call.1} parent=0 // pred_check_branch
    %504 = sbr.rel (0) target = $region33
  $region32: #{tpu_custom_call.1} parent=0 // pred_region
    _
  $region33: #{tpu_custom_call.1} parent=0 // pred_fallthru
    _
  // Predicated region
  $region34: #{tpu_custom_call.1} parent=0 // pred_check
    _
  $region35: #{tpu_custom_call.1} parent=0 // pred_check_branch
    %506 = sbr.rel (0) target = $region37
  $region36: #{tpu_custom_call.1} parent=0 // pred_region
    _
  $region37: #{tpu_custom_call.1} parent=0 // pred_fallthru
    _

</llo_original>
